<compile_context>
chip_gen: v5e
topology: v5e:2x2
jax: 0.10.0
libtpu: 0.0.40
codegen_flags: <defaults>
</compile_context>

<pallas_src>
import functools

import jax
import jax.numpy as jnp
from jax.experimental import pallas as pl
from jax.experimental.pallas import tpu as pltpu


def _round_up(x, m):
    return (x + m - 1) // m * m


_VMEM_LIMIT = 48 * 1024 * 1024
_TM_CANDIDATES = (16384, 8192, 4096, 2048, 1024, 512, 256, 128, 64, 32, 16)


# ----------------------------------------------------------------------------
# Pallas kernels: tiled matmul + fused per-column affine + activation epilogue
# ----------------------------------------------------------------------------
def _apply_act(y, act):
    if act == "leaky_relu":
        return jnp.where(y >= 0, y, 0.01 * y)
    if act == "relu":
        return jnp.maximum(y, 0.0)
    return y


def _mm_kernel_1k(x_ref, w_ref, s_ref, b_ref, o_ref, *, act):
    """Single K step: out = act((x @ w) * scale + shift), no accumulator."""
    y = jnp.dot(x_ref[...], w_ref[...], preferred_element_type=jnp.float32)
    y = y * s_ref[...] + b_ref[...]
    o_ref[...] = _apply_act(y, act).astype(o_ref.dtype)


def _mm_kernel_multik(x_ref, w_ref, s_ref, b_ref, o_ref, acc_ref, *, act):
    """Fallback for very large K: reduction over grid axis 2."""
    @pl.when(pl.program_id(2) == 0)
    def _():
        acc_ref[...] = jnp.zeros_like(acc_ref)

    acc_ref[...] += jnp.dot(x_ref[...], w_ref[...],
                            preferred_element_type=jnp.float32)

    @pl.when(pl.program_id(2) == pl.num_programs(2) - 1)
    def _():
        y = acc_ref[...] * s_ref[...] + b_ref[...]
        o_ref[...] = _apply_act(y, act).astype(o_ref.dtype)


def fused_matmul(x, w, scale, shift, act="none", out_dtype=jnp.float32):
    """act((x @ w) * scale + shift); scale/shift broadcast per output column.

    Inputs cast to bf16 (f32 MXU accumulation). N is never padded.  All GEMMs
    in this model resolve to a single K step (no scratch accumulator)."""
    M, K = x.shape
    K2, N = w.shape
    assert K == K2

    x = x.astype(jnp.bfloat16)
    w = w.astype(jnp.bfloat16)
    sp = scale.astype(jnp.float32).reshape(1, N)
    bp = shift.astype(jnp.float32).reshape(1, N)

    # ---- N tiling ----------------------------------------------------------
    if N <= 512:
        tn = N
    elif M <= 64 and K * N * 2 <= (4 << 20):
        tn = N                      # tiny-M "fat" GEMM (dec_lin): one N block
    else:
        assert N % 128 == 0, N
        tn = 512 if N % 512 == 0 else (256 if N % 256 == 0 else 128)
    tn_pad = _round_up(tn, 128)

    # ---- K tiling: single step whenever the weight block fits VMEM ---------
    if K * tn_pad * 2 <= (5 << 20):
        tk = K
    else:
        tk = 2048
    Kp = _round_up(K, tk)
    tk_pad = _round_up(tk, 128)

    # ---- M tiling: large tiles, but keep >=2 M blocks for megacore ---------
    max_rows = max(16, min((8 << 20) // (2 * tk_pad),     # bf16 x block
                           (6 << 20) // (4 * tn_pad)))    # f32 acc / out block
    m_cap = _round_up(M, 16)
    if M >= 4096:
        m_cap = min(m_cap, _round_up(M // 2, 16))
    tm = 16
    for cand in _TM_CANDIDATES:
        if cand <= max_rows and cand <= m_cap:
            tm = cand
            break
    Mp = _round_up(M, tm)

    if Mp != M or Kp != K:
        x = jnp.pad(x, ((0, Mp - M), (0, Kp - K)))
    if Kp != K:
        w = jnp.pad(w, ((0, Kp - K), (0, 0)))

    if Kp == tk:
        out = pl.pallas_call(
            functools.partial(_mm_kernel_1k, act=act),
            out_shape=jax.ShapeDtypeStruct((Mp, N), out_dtype),
            grid_spec=pltpu.PrefetchScalarGridSpec(
                num_scalar_prefetch=0,
                grid=(Mp // tm, N // tn),
                in_specs=[
                    pl.BlockSpec((tm, tk), lambda i, j: (i, 0)),
                    pl.BlockSpec((tk, tn), lambda i, j: (0, j)),
                    pl.BlockSpec((1, tn), lambda i, j: (0, j)),
                    pl.BlockSpec((1, tn), lambda i, j: (0, j)),
                ],
                out_specs=pl.BlockSpec((tm, tn), lambda i, j: (i, j)),
            ),
            compiler_params=pltpu.CompilerParams(
                dimension_semantics=("parallel", "parallel"),
                vmem_limit_bytes=_VMEM_LIMIT,
            ),
        )(x, w, sp, bp)
    else:
        out = pl.pallas_call(
            functools.partial(_mm_kernel_multik, act=act),
            out_shape=jax.ShapeDtypeStruct((Mp, N), out_dtype),
            grid_spec=pltpu.PrefetchScalarGridSpec(
                num_scalar_prefetch=0,
                grid=(Mp // tm, N // tn, Kp // tk),
                in_specs=[
                    pl.BlockSpec((tm, tk), lambda i, j, k: (i, k)),
                    pl.BlockSpec((tk, tn), lambda i, j, k: (k, j)),
                    pl.BlockSpec((1, tn), lambda i, j, k: (0, j)),
                    pl.BlockSpec((1, tn), lambda i, j, k: (0, j)),
                ],
                out_specs=pl.BlockSpec((tm, tn), lambda i, j, k: (i, j)),
                scratch_shapes=[pltpu.VMEM((tm, tn), jnp.float32)],
            ),
            compiler_params=pltpu.CompilerParams(
                dimension_semantics=("parallel", "parallel", "arbitrary"),
                vmem_limit_bytes=_VMEM_LIMIT,
            ),
        )(x, w, sp, bp)
    if Mp != M:
        out = out[:M]
    return out


# ----------------------------------------------------------------------------
# Encoder block 1: Conv(3->32,s2) + BN + MaxPool(4) + LeakyReLU in ONE kernel
# ----------------------------------------------------------------------------
def _enc1_pool_kernel(x_ref, w_ref, s_ref, b_ref, o_ref, *, wq, cout):
    # GEMM output lanes are (wr, cout) with wr-major (4*cout = 128 lane-dense);
    # rows are ordered (ho, wq_group) so each group of `wq` rows is one ho.
    z = jnp.dot(x_ref[...], w_ref[...], preferred_element_type=jnp.float32)
    z = z * s_ref[...] + b_ref[...]                         # conv bias + BN(eval)
    # MaxPool over the 4 packed output columns (wr): 32-lane groups.
    m = jnp.maximum(jnp.maximum(z[:, 0 * cout:1 * cout], z[:, 1 * cout:2 * cout]),
                    jnp.maximum(z[:, 2 * cout:3 * cout], z[:, 3 * cout:4 * cout]))
    # MaxPool over the 4 row phases (hr = ho % 4): groups of `wq` rows.
    tm = m.shape[0]
    t = tm // (4 * wq)
    m = m.reshape(t, 4, wq, cout)                           # (hq_local, hr, wq, c)
    m = jnp.maximum(jnp.maximum(m[:, 0], m[:, 1]),
                    jnp.maximum(m[:, 2], m[:, 3]))          # (t, wq, c)
    m = m.reshape(t * wq, cout)                             # (tm // 4, c)
    m = jnp.where(m >= 0, m, 0.01 * m)                      # LeakyReLU(0.01)
    o_ref[...] = m.astype(o_ref.dtype)


def enc_block1(x_nchw, w, scale, shift, out_dtype=jnp.bfloat16):
    """Conv2d(3->32,k3,s2,p1) + BatchNorm + MaxPool2d(4) + LeakyReLU, fused.

    Packs 4 neighbouring conv-output columns into the GEMM lane dim (K=27*Cin,
    N=128 lane-dense) and fuses the 4x4 max-pool + LeakyReLU into the epilogue,
    so the (Ho, Wo, 32) conv activation never reaches HBM."""
    Nb, C, H, W = x_nchw.shape
    Cout = w.shape[0]
    Ho, Wo = H // 2, W // 2
    assert Ho % 4 == 0 and Wo % 4 == 0
    Wq = Wo // 4

    # im2col patches for 4 packed output columns, built straight from the NCHW
    # f32 input; K order = (kh, j, cin).
    # TODO(synk): this gather is still a plain-JAX/XLA fusion; an in-kernel
    # strided DMA gather would remove the remaining patch HBM traffic.
    xp = jnp.pad(x_nchw, ((0, 0), (0, 0), (1, 1), (1, 1)))
    cols = [xp[:, :, kh:kh + 2 * (Ho - 1) + 1:2, j:j + 8 * (Wq - 1) + 1:8]
            for kh in range(3) for j in range(9)]            # each (Nb, C, Ho, Wq)
    patches = jnp.stack(cols, axis=1)                        # (Nb, 27, C, Ho, Wq)
    patches = patches.transpose(0, 3, 4, 1, 2)               # (Nb, Ho, Wq, 27, C)
    patches = patches.reshape(Nb * Ho * Wq, 27 * C).astype(jnp.bfloat16)

    # Block-sparse packed weight: We[(kh,j,cin),(wr,co)] = W[co,cin,kh,kw]
    # iff j == 2*wr + kw.
    Wt = w.transpose(2, 3, 1, 0)                             # (kh, kw, cin, co)
    We = jnp.zeros((3, 9, C, 4, Cout), w.dtype)
    for wr in range(4):
        for kw in range(3):
            We = We.at[:, 2 * wr + kw, :, wr, :].set(Wt[:, kw, :, :])
    We = We.reshape(27 * C, 4 * Cout).astype(jnp.bfloat16)

    sp = jnp.tile(scale, 4).astype(jnp.float32).reshape(1, 4 * Cout)
    bp = jnp.tile(shift, 4).astype(jnp.float32).reshape(1, 4 * Cout)

    M = Nb * Ho * Wq
    tm = min(8192, M)
    tm = max(4 * Wq, (tm // (4 * Wq)) * (4 * Wq))  # whole pooled rows per tile
    assert M % tm == 0, (M, tm)

    out = pl.pallas_call(
        functools.partial(_enc1_pool_kernel, wq=Wq, cout=Cout),
        out_shape=jax.ShapeDtypeStruct((M // 4, Cout), out_dtype),
        grid_spec=pltpu.PrefetchScalarGridSpec(
            num_scalar_prefetch=0,
            grid=(M // tm,),
            in_specs=[
                pl.BlockSpec((tm, 27 * C), lambda i: (i, 0)),
                pl.BlockSpec((27 * C, 4 * Cout), lambda i: (0, 0)),
                pl.BlockSpec((1, 4 * Cout), lambda i: (0, 0)),
                pl.BlockSpec((1, 4 * Cout), lambda i: (0, 0)),
            ],
            out_specs=pl.BlockSpec((tm // 4, Cout), lambda i: (i, 0)),
        ),
        compiler_params=pltpu.CompilerParams(
            dimension_semantics=("parallel",),
            vmem_limit_bytes=_VMEM_LIMIT,
        ),
    )(patches, We, sp, bp)
    return out.reshape(Nb, Ho // 4, Wq, Cout)                # NHWC pooled


# ----------------------------------------------------------------------------
# Remaining conv layers as im2col GEMMs (NHWC glue in plain JAX)
# ----------------------------------------------------------------------------
def bn_affine(bias, gamma, beta, mean, var, eps=1e-5):
    s = gamma / jnp.sqrt(var + eps)
    return s, (bias - mean) * s + beta


def conv2d_s2_nhwc(x, w, scale, shift, act, out_dtype=jnp.bfloat16):
    """Conv2d(k=3, s=2, p=1) on NHWC input; w is (Cout, Cin, 3, 3)."""
    Nb, H, W, C = x.shape
    Cout = w.shape[0]
    Ho, Wo = (H + 1) // 2, (W + 1) // 2
    xp = jnp.pad(x, ((0, 0), (1, 1), (1, 1), (0, 0)))
    cols = [xp[:, kh:kh + 2 * (Ho - 1) + 1:2, kw:kw + 2 * (Wo - 1) + 1:2, :]
            for kh in range(3) for kw in range(3)]
    patches = jnp.concatenate(cols, axis=-1).reshape(Nb * Ho * Wo, 9 * C)
    wf = w.transpose(2, 3, 1, 0).reshape(9 * C, Cout)        # K order (kh,kw,cin)
    out = fused_matmul(patches, wf, scale, shift, act, out_dtype)
    return out.reshape(Nb, Ho, Wo, Cout)


def conv_transpose2d_s2_nhwc(x, w_t, scale, shift, act, out_dtype=jnp.bfloat16):
    """ConvTranspose2d(k=3, s=2, p=1, output_padding=1) on NHWC input.

    4-phase subpixel decomposition fused into one GEMM; w_t is (Cin,Cout,3,3)."""
    Nb, H, W, Cin = x.shape
    Cout = w_t.shape[1]
    xe = jnp.pad(x, ((0, 0), (0, 1), (0, 1), (0, 0)))
    x00 = x
    x01 = xe[:, :H, 1:W + 1, :]
    x10 = xe[:, 1:H + 1, :W, :]
    x11 = xe[:, 1:H + 1, 1:W + 1, :]
    patches = jnp.concatenate([x00, x01, x10, x11],
                              axis=-1).reshape(Nb * H * W, 4 * Cin)

    # Rows grouped by shift (x00,x01,x10,x11), cols by output parity
    # (ee, eo, oe, oo); oh = 2*ih - 1 + kh, ow = 2*iw - 1 + kw.
    Wc = jnp.zeros((4, Cin, 4, Cout), w_t.dtype)
    Wc = Wc.at[0, :, 0, :].set(w_t[:, :, 1, 1])   # (even, even)
    Wc = Wc.at[1, :, 1, :].set(w_t[:, :, 1, 0])   # (even, odd)
    Wc = Wc.at[0, :, 1, :].set(w_t[:, :, 1, 2])
    Wc = Wc.at[2, :, 2, :].set(w_t[:, :, 0, 1])   # (odd, even)
    Wc = Wc.at[0, :, 2, :].set(w_t[:, :, 2, 1])
    Wc = Wc.at[3, :, 3, :].set(w_t[:, :, 0, 0])   # (odd, odd)
    Wc = Wc.at[2, :, 3, :].set(w_t[:, :, 0, 2])
    Wc = Wc.at[1, :, 3, :].set(w_t[:, :, 2, 0])
    Wc = Wc.at[0, :, 3, :].set(w_t[:, :, 2, 2])
    Wc = Wc.reshape(4 * Cin, 4 * Cout)

    out = fused_matmul(patches, Wc, jnp.tile(scale, 4), jnp.tile(shift, 4),
                       act=act, out_dtype=out_dtype)          # (Nb*H*W, 4*Cout)
    o = out.reshape(Nb, H, W, 2, 2, Cout)                     # (n,h,w,ph,pw,c)
    return o.transpose(0, 1, 3, 2, 4, 5).reshape(Nb, 2 * H, 2 * W, Cout)


# ----------------------------------------------------------------------------
# Parameters (deterministic synthetic init)
# ----------------------------------------------------------------------------
def init_params(key):
    keys = iter(jax.random.split(key, 80))

    def conv_w(cout, cin):
        return jax.random.normal(next(keys), (cout, cin, 3, 3), jnp.float32) / jnp.sqrt(cin * 9.0)

    def convt_w(cin, cout):
        return jax.random.normal(next(keys), (cin, cout, 3, 3), jnp.float32) / jnp.sqrt(cin * 9.0)

    def lin_w(out_f, in_f):
        return jax.random.normal(next(keys), (out_f, in_f), jnp.float32) / jnp.sqrt(float(in_f))

    def bias(n):
        return 0.01 * jax.random.normal(next(keys), (n,), jnp.float32)

    def bn(n):
        return dict(
            gamma=1.0 + 0.1 * jax.random.normal(next(keys), (n,), jnp.float32),
            beta=0.05 * jax.random.normal(next(keys), (n,), jnp.float32),
            mean=0.05 * jax.random.normal(next(keys), (n,), jnp.float32),
            var=1.0 + 0.1 * jnp.abs(jax.random.normal(next(keys), (n,), jnp.float32)),
        )

    p = {}
    p["enc"] = [
        dict(w=conv_w(32, 3), b=bias(32), bn=bn(32)),
        dict(w=conv_w(64, 32), b=bias(64), bn=bn(64)),
        dict(w=conv_w(64, 64), b=bias(64), bn=bn(64)),
        dict(w=conv_w(64, 64), b=bias(64), bn=bn(64)),
        dict(w=conv_w(64, 64), b=bias(64), bn=bn(64)),
    ]
    p["mu"] = dict(w=lin_w(50, 16384), b=bias(50))
    p["log_var"] = dict(w=lin_w(50, 16384), b=bias(50))
    p["dec_lin"] = dict(w=lin_w(16384, 50), b=bias(16384))
    p["dec"] = [
        dict(w=convt_w(64, 64), b=bias(64), bn=bn(64)),
        dict(w=convt_w(64, 64), b=bias(64), bn=bn(64)),
        dict(w=convt_w(64, 64), b=bias(64), bn=bn(64)),
        dict(w=convt_w(64, 32), b=bias(32), bn=bn(32)),
        dict(w=convt_w(32, 3), b=bias(3)),
    ]
    return p


# ----------------------------------------------------------------------------
# Forward pass (matches RiVAE.forward, eval-mode)
# ----------------------------------------------------------------------------
def rivae_forward(params, x, eps):
    Nb = x.shape[0]

    # ---- encoder ----
    # Block 1: Conv(s2) + BN + MaxPool(4) + LeakyReLU fused in one kernel.
    l0 = params["enc"][0]
    s, t = bn_affine(l0["b"], **l0["bn"])
    h = enc_block1(x, l0["w"], s, t)                          # (Nb,256,256,32)
    # Blocks 2-5: Conv(s2) -> BN -> LeakyReLU -> Dropout(identity)
    for l in params["enc"][1:]:
        s, t = bn_affine(l["b"], **l["bn"])
        h = conv2d_s2_nhwc(h, l["w"], s, t, act="leaky_relu")

    # Flatten in PyTorch NCHW (C,H,W) order to match the Linear weight layout.
    flat = h.transpose(0, 3, 1, 2).reshape(Nb, -1)            # (Nb, 16384)

    # mu and log_var share one GEMM (concatenated weights -> N=100), single step.
    w_ml = jnp.concatenate([params["mu"]["w"].T, params["log_var"]["w"].T], axis=1)
    b_ml = jnp.concatenate([params["mu"]["b"], params["log_var"]["b"]])
    ml = fused_matmul(flat, w_ml, jnp.ones((100,), jnp.float32), b_ml,
                      act="none", out_dtype=jnp.float32)
    mu, log_var = ml[:, :50], ml[:, 50:]

    # Reparameterize (tiny (Nb,50) elementwise; plain-JAX glue).
    z = mu + eps * jnp.exp(0.5 * log_var)

    # ---- decoder ----
    d = fused_matmul(z, params["dec_lin"]["w"].T,
                     jnp.ones((16384,), jnp.float32), params["dec_lin"]["b"],
                     act="none", out_dtype=jnp.bfloat16)       # single grid step
    h = d.reshape(Nb, 64, 16, 16).transpose(0, 2, 3, 1)        # View -> NHWC
    for l in params["dec"][:4]:
        s, t = bn_affine(l["b"], **l["bn"])
        h = conv_transpose2d_s2_nhwc(h, l["w"], s, t, act="leaky_relu")
    last = params["dec"][4]
    h = conv_transpose2d_s2_nhwc(h, last["w"], jnp.ones((3,), jnp.float32),
                                 last["b"], act="relu", out_dtype=jnp.bfloat16)
    recon = h.transpose(0, 3, 1, 2).astype(jnp.float32)        # NHWC -> NCHW
    return recon, mu, log_var


# ----------------------------------------------------------------------------
# Small-shape pure-JAX references for the two hand-packed layouts
# ----------------------------------------------------------------------------
def _enc_block1_ref(x_nchw, w, s, t):
    xb = x_nchw.astype(jnp.bfloat16).astype(jnp.float32)
    wb = w.astype(jnp.bfloat16).astype(jnp.float32)
    y = jax.lax.conv_general_dilated(
        xb, wb, window_strides=(2, 2), padding=((1, 1), (1, 1)),
        dimension_numbers=("NCHW", "OIHW", "NCHW"),
        precision=jax.lax.Precision.HIGHEST)
    y = y * s[None, :, None, None] + t[None, :, None, None]
    Nb, C, Ho, Wo = y.shape
    y = y.reshape(Nb, C, Ho // 4, 4, Wo // 4, 4).max(axis=(3, 5))
    y = jnp.where(y >= 0, y, 0.01 * y)
    return y.transpose(0, 2, 3, 1)                             # NHWC


def _conv_transpose_ref(x_nhwc, w_t, bias):
    xb = x_nhwc.astype(jnp.bfloat16).astype(jnp.float32).transpose(0, 3, 1, 2)
    wb = w_t.astype(jnp.bfloat16).astype(jnp.float32)
    wf = wb.transpose(1, 0, 2, 3)[:, :, ::-1, ::-1]            # (O,I,kh,kw) flip
    y = jax.lax.conv_general_dilated(
        xb, wf, window_strides=(1, 1), padding=((1, 2), (1, 2)),
        lhs_dilation=(2, 2), dimension_numbers=("NCHW", "OIHW", "NCHW"),
        precision=jax.lax.Precision.HIGHEST)
    y = y + bias[None, :, None, None]
    return y.transpose(0, 2, 3, 1)                             # NHWC


if __name__ == "__main__":
    key = jax.random.PRNGKey(0)
    kp, kx, ke, ks1, ks2 = jax.random.split(key, 5)
    params = init_params(kp)

    # --- small-shape correctness checks of the hand-packed kernels ---
    l0 = params["enc"][0]
    s0, t0 = bn_affine(l0["b"], **l0["bn"])
    xs = jax.random.normal(ks1, (1, 3, 64, 64), jnp.float32)
    got = enc_block1(xs, l0["w"], s0, t0).astype(jnp.float32)
    ref = _enc_block1_ref(xs, l0["w"], s0, t0)
    assert float(jnp.max(jnp.abs(got - ref))) < 5e-2

    wt = params["dec"][0]["w"]
    bt = params["dec"][0]["b"]
    xt = jax.random.normal(ks2, (1, 8, 8, 64), jnp.float32)
    got_t = conv_transpose2d_s2_nhwc(
        xt, wt, jnp.ones((64,), jnp.float32), bt, act="none").astype(jnp.float32)
    ref_t = _conv_transpose_ref(xt, wt, bt)
    assert float(jnp.max(jnp.abs(got_t - ref_t))) < 5e-2

    # --- full forward; Linear(16384) forces a 2048x2048 input, batch=1 ---
    x = jax.random.normal(kx, (1, 3, 2048, 2048), jnp.float32)
    eps = jax.random.normal(ke, (1, 50), jnp.float32)          # randn_like eps

    fwd = jax.jit(rivae_forward)
    recon, mu, log_var = fwd(params, x, eps)
    jax.block_until_ready((recon, mu, log_var))

    assert recon.shape == (1, 3, 512, 512), recon.shape
    assert mu.shape == (1, 50) and log_var.shape == (1, 50)
    assert bool(jnp.all(jnp.isfinite(recon)))
    assert bool(jnp.all(recon >= 0.0))   # final ReLU
    print("KERNEL_OK")
</pallas_src>

<mosaic_0001>
module attributes {stable_mosaic.version = 11 : i64} {
  func.func @_enc1_pool_kernel(%arg0: i32, %arg1: memref<256x81xbf16, #tpu.memory_space<vmem>>, %arg2: memref<81x128xbf16, #tpu.memory_space<vmem>>, %arg3: memref<1x128xf32, #tpu.memory_space<vmem>>, %arg4: memref<1x128xf32, #tpu.memory_space<vmem>>, %arg5: memref<64x32xbf16, #tpu.memory_space<vmem>>) attributes {dimension_semantics = [#tpu.dimension_semantics<parallel>], iteration_bounds = array<i64: 1>, scalar_prefetch = 0 : i64, scratch_operands = 0 : i64, tpu.core_type = #tpu.core_type<tc>, window_params = [{transform_indices = @transform_0, window_bounds = array<i64: 256, 81>}, {pipeline_mode = #tpu.pipeline_mode<synchronous>, transform_indices = @transform_1, window_bounds = array<i64: 81, 128>}, {pipeline_mode = #tpu.pipeline_mode<synchronous>, transform_indices = @transform_2, window_bounds = array<i64: 1, 128>}, {pipeline_mode = #tpu.pipeline_mode<synchronous>, transform_indices = @transform_3, window_bounds = array<i64: 1, 128>}, {transform_indices = @transform_4, window_bounds = array<i64: 64, 32>}]} {
    %c0 = arith.constant 0 : index
    %c0_0 = arith.constant 0 : index
    %0 = vector.load %arg1[%c0, %c0_0] : memref<256x81xbf16, #tpu.memory_space<vmem>>, vector<256x81xbf16>
    %c0_1 = arith.constant 0 : index
    %c0_2 = arith.constant 0 : index
    %1 = vector.load %arg2[%c0_1, %c0_2] : memref<81x128xbf16, #tpu.memory_space<vmem>>, vector<81x128xbf16>
    %cst = arith.constant dense<0.000000e+00> : vector<256x128xf32>
    %2 = tpu.matmul %0, %1, %cst {dimension_numbers = #tpu.dot_dimension_numbers<[1], [0], [0], [1], [0, 0, 1, 1], [], []>} : vector<256x81xbf16>, vector<81x128xbf16>, vector<256x128xf32> -> vector<256x128xf32>
    %c0_3 = arith.constant 0 : index
    %c0_4 = arith.constant 0 : index
    %3 = vector.load %arg3[%c0_3, %c0_4] : memref<1x128xf32, #tpu.memory_space<vmem>>, vector<1x128xf32>
    %4 = vector.broadcast %3 : vector<1x128xf32> to vector<256x128xf32>
    %5 = arith.mulf %2, %4 : vector<256x128xf32>
    %c0_5 = arith.constant 0 : index
    %c0_6 = arith.constant 0 : index
    %6 = vector.load %arg4[%c0_5, %c0_6] : memref<1x128xf32, #tpu.memory_space<vmem>>, vector<1x128xf32>
    %7 = vector.broadcast %6 : vector<1x128xf32> to vector<256x128xf32>
    %8 = arith.addf %5, %7 : vector<256x128xf32>
    %9 = vector.extract_strided_slice %8 {offsets = [0, 0], sizes = [256, 32], strides = [1, 1]} : vector<256x128xf32> to vector<256x32xf32>
    %10 = vector.extract_strided_slice %8 {offsets = [0, 32], sizes = [256, 32], strides = [1, 1]} : vector<256x128xf32> to vector<256x32xf32>
    %11 = arith.maximumf %9, %10 : vector<256x32xf32>
    %12 = vector.extract_strided_slice %8 {offsets = [0, 64], sizes = [256, 32], strides = [1, 1]} : vector<256x128xf32> to vector<256x32xf32>
    %13 = vector.extract_strided_slice %8 {offsets = [0, 96], sizes = [256, 32], strides = [1, 1]} : vector<256x128xf32> to vector<256x32xf32>
    %14 = arith.maximumf %12, %13 : vector<256x32xf32>
    %15 = arith.maximumf %11, %14 : vector<256x32xf32>
    %16 = vector.shape_cast %15 : vector<256x32xf32> to vector<8x4x8x32xf32>
    %17 = vector.extract_strided_slice %16 {offsets = [0, 0, 0, 0], sizes = [8, 1, 8, 32], strides = [1, 1, 1, 1]} : vector<8x4x8x32xf32> to vector<8x1x8x32xf32>
    %18 = vector.shape_cast %17 : vector<8x1x8x32xf32> to vector<8x8x32xf32>
    %19 = vector.extract_strided_slice %16 {offsets = [0, 1, 0, 0], sizes = [8, 1, 8, 32], strides = [1, 1, 1, 1]} : vector<8x4x8x32xf32> to vector<8x1x8x32xf32>
    %20 = vector.shape_cast %19 : vector<8x1x8x32xf32> to vector<8x8x32xf32>
    %21 = arith.maximumf %18, %20 : vector<8x8x32xf32>
    %22 = vector.extract_strided_slice %16 {offsets = [0, 2, 0, 0], sizes = [8, 1, 8, 32], strides = [1, 1, 1, 1]} : vector<8x4x8x32xf32> to vector<8x1x8x32xf32>
    %23 = vector.shape_cast %22 : vector<8x1x8x32xf32> to vector<8x8x32xf32>
    %24 = vector.extract_strided_slice %16 {offsets = [0, 3, 0, 0], sizes = [8, 1, 8, 32], strides = [1, 1, 1, 1]} : vector<8x4x8x32xf32> to vector<8x1x8x32xf32>
    %25 = vector.shape_cast %24 : vector<8x1x8x32xf32> to vector<8x8x32xf32>
    %26 = arith.maximumf %23, %25 : vector<8x8x32xf32>
    %27 = arith.maximumf %21, %26 : vector<8x8x32xf32>
    %28 = vector.shape_cast %27 : vector<8x8x32xf32> to vector<64x32xf32>
    %cst_7 = arith.constant 0.000000e+00 : f32
    %29 = vector.broadcast %cst_7 : f32 to vector<64x32xf32>
    %30 = arith.cmpf oge, %28, %29 : vector<64x32xf32>
    %cst_8 = arith.constant 0.00999999977 : f32
    %31 = vector.broadcast %cst_8 : f32 to vector<64x32xf32>
    %32 = arith.mulf %31, %28 : vector<64x32xf32>
    %33 = arith.select %30, %28, %32 : vector<64x32xi1>, vector<64x32xf32>
    %34 = arith.truncf %33 : vector<64x32xf32> to vector<64x32xbf16>
    %c0_9 = arith.constant 0 : index
    %c0_10 = arith.constant 0 : index
    %35 = vector.load %arg5[%c0_9, %c0_10] : memref<64x32xbf16, #tpu.memory_space<vmem>>, vector<64x32xbf16>
    tpu.vector_store %arg5[%c0_9, %c0_10], %34 {strides = array<i32>} : memref<64x32xbf16, #tpu.memory_space<vmem>>, vector<64x32xbf16>,
    return
  }
  func.func @transform_0(%arg0: i32) -> (i32, i32) {
    %c0_i32 = arith.constant 0 : i32
    %c0_i32_0 = arith.constant 0 : i32
    return %arg0, %c0_i32 : i32, i32
  }
  func.func @transform_1(%arg0: i32) -> (i32, i32) {
    %c0_i32 = arith.constant 0 : i32
    %c0_i32_0 = arith.constant 0 : i32
    %c0_i32_1 = arith.constant 0 : i32
    return %c0_i32, %c0_i32_0 : i32, i32
  }
  func.func @transform_2(%arg0: i32) -> (i32, i32) {
    %c0_i32 = arith.constant 0 : i32
    %c0_i32_0 = arith.constant 0 : i32
    %c0_i32_1 = arith.constant 0 : i32
    return %c0_i32, %c0_i32_0 : i32, i32
  }
  func.func @transform_3(%arg0: i32) -> (i32, i32) {
    %c0_i32 = arith.constant 0 : i32
    %c0_i32_0 = arith.constant 0 : i32
    %c0_i32_1 = arith.constant 0 : i32
    return %c0_i32, %c0_i32_0 : i32, i32
  }
  func.func @transform_4(%arg0: i32) -> (i32, i32) {
    %c0_i32 = arith.constant 0 : i32
    %c0_i32_0 = arith.constant 0 : i32
    return %arg0, %c0_i32 : i32, i32
  }
}

</mosaic_0001>

<llo_original>
// kernel: tpu_custom_call.1
$region0: #{tpu_custom_call.1}
  #allocation0 [shape = 'u32[]', space=smem, size = 0x4, offset = 0x4, fixed_abs, tag = 'smem constant byte address 0x4 - core index']
  #allocation1 [shape = 'u32[72,128]{1,0:T(1,128)}', space=vmem, size = 0x9000, scoped, tag = 'internal scratch']
  %s0 = inlined_call_operand.vmem [shape: bf16[256,81], index: 0, kind: input, shape index: {}]
  %s1 = inlined_call_operand.vmem [shape: bf16[81,128], index: 1, kind: input, shape index: {}]
  %s2 = inlined_call_operand.vmem [shape: f32[1,128], index: 2, kind: input, shape index: {}]
  %s3 = inlined_call_operand.vmem [shape: f32[1,128], index: 3, kind: input, shape index: {}]
  %s4 = inlined_call_operand.vmem [shape: bf16[64,32], index: 4, kind: output, shape index: {}]
  %s5 = sld [smem:[#allocation0]]
  $region26: #{tpu_custom_call.1} parent=0
    _
  %s7 = ssub.s32 1, %s5
  %s8 = scalar_select 0, %s7, %s5
  // Predicated region
  $region2: #{tpu_custom_call.1} parent=0 // pred_check
    _
  $region3: #{tpu_custom_call.1} parent=0 // pred_check_branch
    %10 = sbr.rel (0) target = $region5
  $region4: #{tpu_custom_call.1} parent=0 // pred_region
    _
  $region5: #{tpu_custom_call.1} parent=0 // pred_fallthru
    _
  // Predicated region
  $region6: #{tpu_custom_call.1} parent=0 // pred_check
    _
  $region7: #{tpu_custom_call.1} parent=0 // pred_check_branch
    %12 = sbr.rel (0) target = $region9
  $region8: #{tpu_custom_call.1} parent=0 // pred_region
    _
  $region9: #{tpu_custom_call.1} parent=0 // pred_fallthru
    _
  // Predicated region
  $region10: #{tpu_custom_call.1} parent=0 // pred_check
    _
  $region11: #{tpu_custom_call.1} parent=0 // pred_check_branch
    %14 = sbr.rel (0) target = $region13
  $region12: #{tpu_custom_call.1} parent=0 // pred_region
    _
  $region13: #{tpu_custom_call.1} parent=0 // pred_fallthru
    _
  // Predicated region
  $region14: #{tpu_custom_call.1} parent=0 // pred_check
    _
  $region15: #{tpu_custom_call.1} parent=0 // pred_check_branch
    %16 = sbr.rel (0) target = $region17
  $region16: #{tpu_custom_call.1} parent=0 // pred_region
    _
  $region17: #{tpu_custom_call.1} parent=0 // pred_fallthru
    _
  %v18 = vld [vmem:[%s0] sm:$0xf]
  %v19 = vld [vmem:[%s0 + $0x4] sm:$0xf]
  %v20 = vld [vmem:[%s0 + $0x8] sm:$0xf]
  %v21 = vld [vmem:[%s0 + $0xc] sm:$0xf]
  %v22 = vld [vmem:[%s0 + $0x10] sm:$0xf]
  %v23 = vld [vmem:[%s0 + $0x14] sm:$0xf]
  %v24 = vld [vmem:[%s0 + $0x18] sm:$0xf]
  %v25 = vld [vmem:[%s0 + $0x1c] sm:$0xf]
  %v26 = vld [vmem:[%s0 + $0x20] sm:$0xf]
  %v27 = vld [vmem:[%s0 + $0x24] sm:$0xf]
  %v28 = vld [vmem:[%s0 + $0x28] sm:$0xf]
  %v29 = vld [vmem:[%s0 + $0x2c] sm:$0xf]
  %v30 = vld [vmem:[%s0 + $0x30] sm:$0xf]
  %v31 = vld [vmem:[%s0 + $0x34] sm:$0xf]
  %v32 = vld [vmem:[%s0 + $0x38] sm:$0xf]
  %v33 = vld [vmem:[%s0 + $0x3c] sm:$0xf]
  %v34 = vld [vmem:[%s0 + $0x40] sm:$0xf]
  %v35 = vld [vmem:[%s0 + $0x44] sm:$0xf]
  %v36 = vld [vmem:[%s0 + $0x48] sm:$0xf]
  %v37 = vld [vmem:[%s0 + $0x4c] sm:$0xf]
  %v38 = vld [vmem:[%s0 + $0x50] sm:$0xf]
  %v39 = vld [vmem:[%s0 + $0x54] sm:$0xf]
  %v40 = vld [vmem:[%s0 + $0x58] sm:$0xf]
  %v41 = vld [vmem:[%s0 + $0x5c] sm:$0xf]
  %v42 = vld [vmem:[%s0 + $0x60] sm:$0xf]
  %v43 = vld [vmem:[%s0 + $0x64] sm:$0xf]
  %v44 = vld [vmem:[%s0 + $0x68] sm:$0xf]
  %v45 = vld [vmem:[%s0 + $0x6c] sm:$0xf]
  %v46 = vld [vmem:[%s0 + $0x70] sm:$0xf]
  %v47 = vld [vmem:[%s0 + $0x74] sm:$0xf]
  %v48 = vld [vmem:[%s0 + $0x78] sm:$0xf]
  %v49 = vld [vmem:[%s0 + $0x7c] sm:$0xf]
  %v50 = vld [vmem:[%s1] sm:$0xf]
  %v51 = vld [vmem:[%s1 + $0x4] sm:$0xf]
  %v52 = vld [vmem:[%s1 + $0x8] sm:$0xf]
  %v53 = vld [vmem:[%s1 + $0xc] sm:$0xf]
  %v54 = vld [vmem:[%s1 + $0x10] sm:$0xf]
  %v55 = vld [vmem:[%s1 + $0x14] sm:$0xf]
  %v56 = vld [vmem:[%s1 + $0x18] sm:$0xf]
  %v57 = vld [vmem:[%s1 + $0x1c] sm:$0xf]
  %v58 = vld [vmem:[%s1 + $0x20] sm:$0xf]
  %v59 = vld [vmem:[%s1 + $0x24] sm:$0xf]
  %v60 = vld [vmem:[%s1 + $0x28] sm:$0x1]
  %v93 = vunpack.c.l.b16 %v18
  %v94 = vunpack.c.l.b16 %v19
  %v95 = vunpack.c.l.b16 %v20
  %v96 = vunpack.c.l.b16 %v21
  %v97 = vunpack.c.l.b16 %v22
  %v98 = vunpack.c.l.b16 %v23
  %v99 = vunpack.c.l.b16 %v24
  %v100 = vunpack.c.l.b16 %v25
  %v101 = vunpack.c.l.b16 %v26
  %v102 = vunpack.c.l.b16 %v27
  %v103 = vunpack.c.l.b16 %v28
  %v104 = vunpack.c.l.b16 %v29
  %v105 = vunpack.c.l.b16 %v30
  %v106 = vunpack.c.l.b16 %v31
  %v107 = vunpack.c.l.b16 %v32
  %v108 = vunpack.c.l.b16 %v33
  %v109 = vunpack.c.l.b16 %v34
  %v110 = vunpack.c.l.b16 %v35
  %v111 = vunpack.c.l.b16 %v36
  %v112 = vunpack.c.l.b16 %v37
  %v113 = vunpack.c.l.b16 %v38
  %v114 = vunpack.c.l.b16 %v39
  %v115 = vunpack.c.l.b16 %v40
  %v116 = vunpack.c.l.b16 %v41
  %v117 = vunpack.c.l.b16 %v42
  %v118 = vunpack.c.l.b16 %v43
  %v119 = vunpack.c.l.b16 %v44
  %v120 = vunpack.c.l.b16 %v45
  %v121 = vunpack.c.l.b16 %v46
  %v122 = vunpack.c.l.b16 %v47
  %v123 = vunpack.c.l.b16 %v48
  %v124 = vunpack.c.l.b16 %v49
  %v125 = vpack.c.b16 %v94, %v93
  %v126 = vpack.c.b16 %v96, %v95
  %v127 = vpack.c.b16 %v98, %v97
  %v128 = vpack.c.b16 %v100, %v99
  %v129 = vpack.c.b16 %v102, %v101
  %v130 = vpack.c.b16 %v104, %v103
  %v131 = vpack.c.b16 %v106, %v105
  %v132 = vpack.c.b16 %v108, %v107
  %v133 = vpack.c.b16 %v110, %v109
  %v134 = vpack.c.b16 %v112, %v111
  %v135 = vpack.c.b16 %v114, %v113
  %v136 = vpack.c.b16 %v116, %v115
  %v137 = vpack.c.b16 %v118, %v117
  %v138 = vpack.c.b16 %v120, %v119
  %v139 = vpack.c.b16 %v122, %v121
  %v140 = vpack.c.b16 %v124, %v123
  %v152 = vunpack.c.l.b16 %v50
  %v153 = vunpack.c.l.b16 %v51
  %v154 = vunpack.c.l.b16 %v52
  %v155 = vunpack.c.l.b16 %v53
  %v156 = vunpack.c.l.b16 %v54
  %v157 = vunpack.c.l.b16 %v55
  %v158 = vunpack.c.l.b16 %v56
  %v159 = vunpack.c.l.b16 %v57
  %v160 = vunpack.c.l.b16 %v58
  %v161 = vunpack.c.l.b16 %v59
  %v162 = vunpack.c.l.b16 %v60
  %v163 = vpack.c.b16 %v153, %v152
  %v164 = vpack.c.b16 %v155, %v154
  %v165 = vpack.c.b16 %v157, %v156
  %v166 = vpack.c.b16 %v159, %v158
  %v167 = vpack.c.b16 %v161, %v160
  %v168 = vpack.c.b16 %v162, %v162
  %vm174 = vcmask 662528
  %v176 = vsel %vm174, %v125, 0
  %v179 = vsel %vm174, %v126, 0
  %v182 = vsel %vm174, %v127, 0
  %v185 = vsel %vm174, %v128, 0
  %v188 = vsel %vm174, %v129, 0
  %v191 = vsel %vm174, %v130, 0
  %v194 = vsel %vm174, %v131, 0
  %v197 = vsel %vm174, %v132, 0
  %v200 = vsel %vm174, %v133, 0
  %v203 = vsel %vm174, %v134, 0
  %v206 = vsel %vm174, %v135, 0
  %v209 = vsel %vm174, %v136, 0
  %v212 = vsel %vm174, %v137, 0
  %v215 = vsel %vm174, %v138, 0
  %v218 = vsel %vm174, %v139, 0
  %v221 = vsel %vm174, %v140, 0
  %vm223 = vcmask 1040384
  %v224 = vsel 0, 4294967295, 65535
  %v225 = vsel %vm223, %v224, 0
  %v227 = vand.u32 %v168, %v225
  %229 = vmatpush.bf16.msra.mxu0 0
  %230 = vmatpush.bf16.msra.mxu0 0
  %231 = vmatpush.bf16.msra.mxu0 %v227
  %232 = vmatpush.bf16.msra.mxu0 %v167
  %233 = vmatpush.bf16.msra.mxu0 %v166
  %234 = vmatpush.bf16.msra.mxu0 %v165
  %235 = vmatpush.bf16.msra.mxu0 %v164
  %236 = vmatpush.bf16.msra.mxu0 %v163
  %237 = vmatmul.bf16.gmra.mxu0 %v176
  %v238 = vpop.f32.mrf.mxu0
  %v239 = vadd.f32 0.0, %v238
  %v240 = vpop.f32.mrf.mxu0
  %v241 = vadd.f32 0.0, %v240
  %242 = vmatmul.bf16.gmra.mxu0 %v179
  %v243 = vpop.f32.mrf.mxu0
  %v244 = vadd.f32 0.0, %v243
  %v245 = vpop.f32.mrf.mxu0
  %v246 = vadd.f32 0.0, %v245
  %247 = vmatmul.bf16.gmra.mxu0 %v182
  %v248 = vpop.f32.mrf.mxu0
  %v249 = vadd.f32 0.0, %v248
  %v250 = vpop.f32.mrf.mxu0
  %v251 = vadd.f32 0.0, %v250
  %252 = vmatmul.bf16.gmra.mxu0 %v185
  %v253 = vpop.f32.mrf.mxu0
  %v254 = vadd.f32 0.0, %v253
  %v255 = vpop.f32.mrf.mxu0
  %v256 = vadd.f32 0.0, %v255
  %257 = vmatmul.bf16.gmra.mxu0 %v188
  %v258 = vpop.f32.mrf.mxu0
  %v259 = vadd.f32 0.0, %v258
  %v260 = vpop.f32.mrf.mxu0
  %v261 = vadd.f32 0.0, %v260
  %262 = vmatmul.bf16.gmra.mxu0 %v191
  %v263 = vpop.f32.mrf.mxu0
  %v264 = vadd.f32 0.0, %v263
  %v265 = vpop.f32.mrf.mxu0
  %v266 = vadd.f32 0.0, %v265
  %267 = vmatmul.bf16.gmra.mxu0 %v194
  %v268 = vpop.f32.mrf.mxu0
  %v269 = vadd.f32 0.0, %v268
  %v270 = vpop.f32.mrf.mxu0
  %v271 = vadd.f32 0.0, %v270
  %272 = vmatmul.bf16.gmra.mxu0 %v197
  %v273 = vpop.f32.mrf.mxu0
  %v274 = vadd.f32 0.0, %v273
  %v275 = vpop.f32.mrf.mxu0
  %v276 = vadd.f32 0.0, %v275
  %277 = vmatmul.bf16.gmra.mxu0 %v200
  %v278 = vpop.f32.mrf.mxu0
  %v279 = vadd.f32 0.0, %v278
  %v280 = vpop.f32.mrf.mxu0
  %v281 = vadd.f32 0.0, %v280
  %282 = vmatmul.bf16.gmra.mxu0 %v203
  %v283 = vpop.f32.mrf.mxu0
  %v284 = vadd.f32 0.0, %v283
  %v285 = vpop.f32.mrf.mxu0
  %v286 = vadd.f32 0.0, %v285
  %287 = vmatmul.bf16.gmra.mxu0 %v206
  %v288 = vpop.f32.mrf.mxu0
  %v289 = vadd.f32 0.0, %v288
  %v290 = vpop.f32.mrf.mxu0
  %v291 = vadd.f32 0.0, %v290
  %292 = vmatmul.bf16.gmra.mxu0 %v209
  %v293 = vpop.f32.mrf.mxu0
  %v294 = vadd.f32 0.0, %v293
  %v295 = vpop.f32.mrf.mxu0
  %v296 = vadd.f32 0.0, %v295
  %297 = vmatmul.bf16.gmra.mxu0 %v212
  %v298 = vpop.f32.mrf.mxu0
  %v299 = vadd.f32 0.0, %v298
  %v300 = vpop.f32.mrf.mxu0
  %v301 = vadd.f32 0.0, %v300
  %302 = vmatmul.bf16.gmra.mxu0 %v215
  %v303 = vpop.f32.mrf.mxu0
  %v304 = vadd.f32 0.0, %v303
  %v305 = vpop.f32.mrf.mxu0
  %v306 = vadd.f32 0.0, %v305
  %307 = vmatmul.bf16.gmra.mxu0 %v218
  %v308 = vpop.f32.mrf.mxu0
  %v309 = vadd.f32 0.0, %v308
  %v310 = vpop.f32.mrf.mxu0
  %v311 = vadd.f32 0.0, %v310
  %312 = vmatmul.bf16.gmra.mxu0 %v221
  %v313 = vpop.f32.mrf.mxu0
  %v314 = vadd.f32 0.0, %v313
  %v315 = vpop.f32.mrf.mxu0
  %v316 = vadd.f32 0.0, %v315
  %317 = vdwg.mxu0
  %v318 = vld [vmem:[%s2] sm:$0x1]
  %v320 = vperm.slane %v318, 0
  %v322 = vmul.f32 %v239, %v320
  %v323 = vmul.f32 %v241, %v320
  %v324 = vmul.f32 %v244, %v320
  %v325 = vmul.f32 %v246, %v320
  %v326 = vmul.f32 %v249, %v320
  %v327 = vmul.f32 %v251, %v320
  %v328 = vmul.f32 %v254, %v320
  %v329 = vmul.f32 %v256, %v320
  %v330 = vmul.f32 %v259, %v320
  %v331 = vmul.f32 %v261, %v320
  %v332 = vmul.f32 %v264, %v320
  %v333 = vmul.f32 %v266, %v320
  %v334 = vmul.f32 %v269, %v320
  %v335 = vmul.f32 %v271, %v320
  %v336 = vmul.f32 %v274, %v320
  %v337 = vmul.f32 %v276, %v320
  %v338 = vmul.f32 %v279, %v320
  %v339 = vmul.f32 %v281, %v320
  %v340 = vmul.f32 %v284, %v320
  %v341 = vmul.f32 %v286, %v320
  %v342 = vmul.f32 %v289, %v320
  %v343 = vmul.f32 %v291, %v320
  %v344 = vmul.f32 %v294, %v320
  %v345 = vmul.f32 %v296, %v320
  %v346 = vmul.f32 %v299, %v320
  %v347 = vmul.f32 %v301, %v320
  %v348 = vmul.f32 %v304, %v320
  %v349 = vmul.f32 %v306, %v320
  %v350 = vmul.f32 %v309, %v320
  %v351 = vmul.f32 %v311, %v320
  %v352 = vmul.f32 %v314, %v320
  %v353 = vmul.f32 %v316, %v320
  %v354 = vld [vmem:[%s3] sm:$0x1]
  %v356 = vperm.slane %v354, 0
  %v358 = vadd.f32 %v322, %v356
  %v359 = vadd.f32 %v323, %v356
  %v360 = vadd.f32 %v324, %v356
  %v361 = vadd.f32 %v325, %v356
  %v362 = vadd.f32 %v326, %v356
  %v363 = vadd.f32 %v327, %v356
  %v364 = vadd.f32 %v328, %v356
  %v365 = vadd.f32 %v329, %v356
  %v366 = vadd.f32 %v330, %v356
  %v367 = vadd.f32 %v331, %v356
  %v368 = vadd.f32 %v332, %v356
  %v369 = vadd.f32 %v333, %v356
  %v370 = vadd.f32 %v334, %v356
  %v371 = vadd.f32 %v335, %v356
  %v372 = vadd.f32 %v336, %v356
  %v373 = vadd.f32 %v337, %v356
  %v374 = vadd.f32 %v338, %v356
  %v375 = vadd.f32 %v339, %v356
  %v376 = vadd.f32 %v340, %v356
  %v377 = vadd.f32 %v341, %v356
  %v378 = vadd.f32 %v342, %v356
  %v379 = vadd.f32 %v343, %v356
  %v380 = vadd.f32 %v344, %v356
  %v381 = vadd.f32 %v345, %v356
  %v382 = vadd.f32 %v346, %v356
  %v383 = vadd.f32 %v347, %v356
  %v384 = vadd.f32 %v348, %v356
  %v385 = vadd.f32 %v349, %v356
  %v386 = vadd.f32 %v350, %v356
  %v387 = vadd.f32 %v351, %v356
  %v388 = vadd.f32 %v352, %v356
  %v389 = vadd.f32 %v353, %v356
  %422 = vrot.lane.b32.xlu0 %v358, 96
  %v423 = vpop.permute.xlu0 %422
  %424 = vrot.lane.b32.xlu0 %v359, 96
  %v425 = vpop.permute.xlu0 %424
  %426 = vrot.lane.b32.xlu0 %v360, 96
  %v427 = vpop.permute.xlu0 %426
  %428 = vrot.lane.b32.xlu0 %v361, 96
  %v429 = vpop.permute.xlu0 %428
  %430 = vrot.lane.b32.xlu0 %v362, 96
  %v431 = vpop.permute.xlu0 %430
  %432 = vrot.lane.b32.xlu0 %v363, 96
  %v433 = vpop.permute.xlu0 %432
  %434 = vrot.lane.b32.xlu0 %v364, 96
  %v435 = vpop.permute.xlu0 %434
  %436 = vrot.lane.b32.xlu0 %v365, 96
  %v437 = vpop.permute.xlu0 %436
  %438 = vrot.lane.b32.xlu0 %v366, 96
  %v439 = vpop.permute.xlu0 %438
  %440 = vrot.lane.b32.xlu0 %v367, 96
  %v441 = vpop.permute.xlu0 %440
  %442 = vrot.lane.b32.xlu0 %v368, 96
  %v443 = vpop.permute.xlu0 %442
  %444 = vrot.lane.b32.xlu0 %v369, 96
  %v445 = vpop.permute.xlu0 %444
  %446 = vrot.lane.b32.xlu0 %v370, 96
  %v447 = vpop.permute.xlu0 %446
  %448 = vrot.lane.b32.xlu0 %v371, 96
  %v449 = vpop.permute.xlu0 %448
  %450 = vrot.lane.b32.xlu0 %v372, 96
  %v451 = vpop.permute.xlu0 %450
  %452 = vrot.lane.b32.xlu0 %v373, 96
  %v453 = vpop.permute.xlu0 %452
  %454 = vrot.lane.b32.xlu0 %v374, 96
  %v455 = vpop.permute.xlu0 %454
  %456 = vrot.lane.b32.xlu0 %v375, 96
  %v457 = vpop.permute.xlu0 %456
  %458 = vrot.lane.b32.xlu0 %v376, 96
  %v459 = vpop.permute.xlu0 %458
  %460 = vrot.lane.b32.xlu0 %v377, 96
  %v461 = vpop.permute.xlu0 %460
  %462 = vrot.lane.b32.xlu0 %v378, 96
  %v463 = vpop.permute.xlu0 %462
  %464 = vrot.lane.b32.xlu0 %v379, 96
  %v465 = vpop.permute.xlu0 %464
  %466 = vrot.lane.b32.xlu0 %v380, 96
  %v467 = vpop.permute.xlu0 %466
  %468 = vrot.lane.b32.xlu0 %v381, 96
  %v469 = vpop.permute.xlu0 %468
  %470 = vrot.lane.b32.xlu0 %v382, 96
  %v471 = vpop.permute.xlu0 %470
  %472 = vrot.lane.b32.xlu0 %v383, 96
  %v473 = vpop.permute.xlu0 %472
  %474 = vrot.lane.b32.xlu0 %v384, 96
  %v475 = vpop.permute.xlu0 %474
  %476 = vrot.lane.b32.xlu0 %v385, 96
  %v477 = vpop.permute.xlu0 %476
  %478 = vrot.lane.b32.xlu0 %v386, 96
  %v479 = vpop.permute.xlu0 %478
  %480 = vrot.lane.b32.xlu0 %v387, 96
  %v481 = vpop.permute.xlu0 %480
  %482 = vrot.lane.b32.xlu0 %v388, 96
  %v483 = vpop.permute.xlu0 %482
  %484 = vrot.lane.b32.xlu0 %v389, 96
  %v485 = vpop.permute.xlu0 %484
  %v518 = vmax.f32 %v358, %v423
  %v519 = vmax.f32 %v359, %v425
  %v520 = vmax.f32 %v360, %v427
  %v521 = vmax.f32 %v361, %v429
  %v522 = vmax.f32 %v362, %v431
  %v523 = vmax.f32 %v363, %v433
  %v524 = vmax.f32 %v364, %v435
  %v525 = vmax.f32 %v365, %v437
  %v526 = vmax.f32 %v366, %v439
  %v527 = vmax.f32 %v367, %v441
  %v528 = vmax.f32 %v368, %v443
  %v529 = vmax.f32 %v369, %v445
  %v530 = vmax.f32 %v370, %v447
  %v531 = vmax.f32 %v371, %v449
  %v532 = vmax.f32 %v372, %v451
  %v533 = vmax.f32 %v373, %v453
  %v534 = vmax.f32 %v374, %v455
  %v535 = vmax.f32 %v375, %v457
  %v536 = vmax.f32 %v376, %v459
  %v537 = vmax.f32 %v377, %v461
  %v538 = vmax.f32 %v378, %v463
  %v539 = vmax.f32 %v379, %v465
  %v540 = vmax.f32 %v380, %v467
  %v541 = vmax.f32 %v381, %v469
  %v542 = vmax.f32 %v382, %v471
  %v543 = vmax.f32 %v383, %v473
  %v544 = vmax.f32 %v384, %v475
  %v545 = vmax.f32 %v385, %v477
  %v546 = vmax.f32 %v386, %v479
  %v547 = vmax.f32 %v387, %v481
  %v548 = vmax.f32 %v388, %v483
  %v549 = vmax.f32 %v389, %v485
  %582 = vrot.lane.b32.xlu0 %v518, 64
  %v583 = vpop.permute.xlu0 %582
  %584 = vrot.lane.b32.xlu0 %v519, 64
  %v585 = vpop.permute.xlu0 %584
  %586 = vrot.lane.b32.xlu0 %v520, 64
  %v587 = vpop.permute.xlu0 %586
  %588 = vrot.lane.b32.xlu0 %v521, 64
  %v589 = vpop.permute.xlu0 %588
  %590 = vrot.lane.b32.xlu0 %v522, 64
  %v591 = vpop.permute.xlu0 %590
  %592 = vrot.lane.b32.xlu0 %v523, 64
  %v593 = vpop.permute.xlu0 %592
  %594 = vrot.lane.b32.xlu0 %v524, 64
  %v595 = vpop.permute.xlu0 %594
  %596 = vrot.lane.b32.xlu0 %v525, 64
  %v597 = vpop.permute.xlu0 %596
  %598 = vrot.lane.b32.xlu0 %v526, 64
  %v599 = vpop.permute.xlu0 %598
  %600 = vrot.lane.b32.xlu0 %v527, 64
  %v601 = vpop.permute.xlu0 %600
  %602 = vrot.lane.b32.xlu0 %v528, 64
  %v603 = vpop.permute.xlu0 %602
  %604 = vrot.lane.b32.xlu0 %v529, 64
  %v605 = vpop.permute.xlu0 %604
  %606 = vrot.lane.b32.xlu0 %v530, 64
  %v607 = vpop.permute.xlu0 %606
  %608 = vrot.lane.b32.xlu0 %v531, 64
  %v609 = vpop.permute.xlu0 %608
  %610 = vrot.lane.b32.xlu0 %v532, 64
  %v611 = vpop.permute.xlu0 %610
  %612 = vrot.lane.b32.xlu0 %v533, 64
  %v613 = vpop.permute.xlu0 %612
  %614 = vrot.lane.b32.xlu0 %v534, 64
  %v615 = vpop.permute.xlu0 %614
  %616 = vrot.lane.b32.xlu0 %v535, 64
  %v617 = vpop.permute.xlu0 %616
  %618 = vrot.lane.b32.xlu0 %v536, 64
  %v619 = vpop.permute.xlu0 %618
  %620 = vrot.lane.b32.xlu0 %v537, 64
  %v621 = vpop.permute.xlu0 %620
  %622 = vrot.lane.b32.xlu0 %v538, 64
  %v623 = vpop.permute.xlu0 %622
  %624 = vrot.lane.b32.xlu0 %v539, 64
  %v625 = vpop.permute.xlu0 %624
  %626 = vrot.lane.b32.xlu0 %v540, 64
  %v627 = vpop.permute.xlu0 %626
  %628 = vrot.lane.b32.xlu0 %v541, 64
  %v629 = vpop.permute.xlu0 %628
  %630 = vrot.lane.b32.xlu0 %v542, 64
  %v631 = vpop.permute.xlu0 %630
  %632 = vrot.lane.b32.xlu0 %v543, 64
  %v633 = vpop.permute.xlu0 %632
  %634 = vrot.lane.b32.xlu0 %v544, 64
  %v635 = vpop.permute.xlu0 %634
  %636 = vrot.lane.b32.xlu0 %v545, 64
  %v637 = vpop.permute.xlu0 %636
  %638 = vrot.lane.b32.xlu0 %v546, 64
  %v639 = vpop.permute.xlu0 %638
  %640 = vrot.lane.b32.xlu0 %v547, 64
  %v641 = vpop.permute.xlu0 %640
  %642 = vrot.lane.b32.xlu0 %v548, 64
  %v643 = vpop.permute.xlu0 %642
  %644 = vrot.lane.b32.xlu0 %v549, 64
  %v645 = vpop.permute.xlu0 %644
  %v678 = vmax.f32 %v518, %v583
  %v679 = vmax.f32 %v519, %v585
  %v680 = vmax.f32 %v520, %v587
  %v681 = vmax.f32 %v521, %v589
  %v682 = vmax.f32 %v522, %v591
  %v683 = vmax.f32 %v523, %v593
  %v684 = vmax.f32 %v524, %v595
  %v685 = vmax.f32 %v525, %v597
  %v686 = vmax.f32 %v526, %v599
  %v687 = vmax.f32 %v527, %v601
  %v688 = vmax.f32 %v528, %v603
  %v689 = vmax.f32 %v529, %v605
  %v690 = vmax.f32 %v530, %v607
  %v691 = vmax.f32 %v531, %v609
  %v692 = vmax.f32 %v532, %v611
  %v693 = vmax.f32 %v533, %v613
  %v694 = vmax.f32 %v534, %v615
  %v695 = vmax.f32 %v535, %v617
  %v696 = vmax.f32 %v536, %v619
  %v697 = vmax.f32 %v537, %v621
  %v698 = vmax.f32 %v538, %v623
  %v699 = vmax.f32 %v539, %v625
  %v700 = vmax.f32 %v540, %v627
  %v701 = vmax.f32 %v541, %v629
  %v702 = vmax.f32 %v542, %v631
  %v703 = vmax.f32 %v543, %v633
  %v704 = vmax.f32 %v544, %v635
  %v705 = vmax.f32 %v545, %v637
  %v706 = vmax.f32 %v546, %v639
  %v707 = vmax.f32 %v547, %v641
  %v708 = vmax.f32 %v548, %v643
  %v709 = vmax.f32 %v549, %v645
  %v710 = vmax.f32 %v678, %v679
  %v711 = vmax.f32 %v682, %v683
  %v712 = vmax.f32 %v686, %v687
  %v713 = vmax.f32 %v690, %v691
  %v714 = vmax.f32 %v694, %v695
  %v715 = vmax.f32 %v698, %v699
  %v716 = vmax.f32 %v702, %v703
  %v717 = vmax.f32 %v706, %v707
  %v718 = vmax.f32 %v680, %v681
  %v719 = vmax.f32 %v684, %v685
  %v720 = vmax.f32 %v688, %v689
  %v721 = vmax.f32 %v692, %v693
  %v722 = vmax.f32 %v696, %v697
  %v723 = vmax.f32 %v700, %v701
  %v724 = vmax.f32 %v704, %v705
  %v725 = vmax.f32 %v708, %v709
  %v726 = vmax.f32 %v710, %v718
  %v727 = vmax.f32 %v711, %v719
  %v728 = vmax.f32 %v712, %v720
  %v729 = vmax.f32 %v713, %v721
  %v730 = vmax.f32 %v714, %v722
  %v731 = vmax.f32 %v715, %v723
  %v732 = vmax.f32 %v716, %v724
  %v733 = vmax.f32 %v717, %v725
  %vm734 = vcmp.ge.f32.partialorder %v726, 0.0
  %vm735 = vcmp.ge.f32.partialorder %v727, 0.0
  %vm736 = vcmp.ge.f32.partialorder %v728, 0.0
  %vm737 = vcmp.ge.f32.partialorder %v729, 0.0
  %vm738 = vcmp.ge.f32.partialorder %v730, 0.0
  %vm739 = vcmp.ge.f32.partialorder %v731, 0.0
  %vm740 = vcmp.ge.f32.partialorder %v732, 0.0
  %vm741 = vcmp.ge.f32.partialorder %v733, 0.0
  %v742 = vmul.f32 %v726, 0.01
  %v743 = vmul.f32 %v727, 0.01
  %v744 = vmul.f32 %v728, 0.01
  %v745 = vmul.f32 %v729, 0.01
  %v746 = vmul.f32 %v730, 0.01
  %v747 = vmul.f32 %v731, 0.01
  %v748 = vmul.f32 %v732, 0.01
  %v749 = vmul.f32 %v733, 0.01
  %v750 = vsel %vm734, %v726, %v742
  %v751 = vsel %vm735, %v727, %v743
  %v752 = vsel %vm736, %v728, %v744
  %v753 = vsel %vm737, %v729, %v745
  %v754 = vsel %vm738, %v730, %v746
  %v755 = vsel %vm739, %v731, %v747
  %v756 = vsel %vm740, %v732, %v748
  %v757 = vsel %vm741, %v733, %v749
  %v758 = vpack.c.bf16 %v750, %v750
  %v759 = vpack.c.bf16 %v751, %v751
  %v760 = vpack.c.bf16 %v752, %v752
  %v761 = vpack.c.bf16 %v753, %v753
  %v762 = vpack.c.bf16 %v754, %v754
  %v763 = vpack.c.bf16 %v755, %v755
  %v764 = vpack.c.bf16 %v756, %v756
  %v765 = vpack.c.bf16 %v757, %v757
  %vm766 = vcmask 257024
  %767 = vst.msk [vmem:[%s4] sm:$0xf] %vm766, %v758
  %768 = vst.msk [vmem:[%s4 + $0x4] sm:$0xf] %vm766, %v759
  %769 = vst.msk [vmem:[%s4 + $0x8] sm:$0xf] %vm766, %v760
  %770 = vst.msk [vmem:[%s4 + $0xc] sm:$0xf] %vm766, %v761
  %771 = vst.msk [vmem:[%s4 + $0x10] sm:$0xf] %vm766, %v762
  %772 = vst.msk [vmem:[%s4 + $0x14] sm:$0xf] %vm766, %v763
  %773 = vst.msk [vmem:[%s4 + $0x18] sm:$0xf] %vm766, %v764
  %774 = vst.msk [vmem:[%s4 + $0x1c] sm:$0xf] %vm766, %v765
  // Predicated region
  $region18: #{tpu_custom_call.1} parent=0 // pred_check
    _
  $region19: #{tpu_custom_call.1} parent=0 // pred_check_branch
    %776 = sbr.rel (0) target = $region21
  $region20: #{tpu_custom_call.1} parent=0 // pred_region
    _
  $region21: #{tpu_custom_call.1} parent=0 // pred_fallthru
    _
  // Predicated region
  $region22: #{tpu_custom_call.1} parent=0 // pred_check
    _
  $region23: #{tpu_custom_call.1} parent=0 // pred_check_branch
    %778 = sbr.rel (0) target = $region25
  $region24: #{tpu_custom_call.1} parent=0 // pred_region
    _
  $region25: #{tpu_custom_call.1} parent=0 // pred_fallthru
    _

</llo_original>
